<compile_context>
chip_gen: v5e
topology: v5e:2x2
jax: 0.10.0
libtpu: 0.0.40
codegen_flags: <defaults>
</compile_context>

<pallas_src>
import functools
import math

import jax
import jax.numpy as jnp
import numpy as np
from jax.experimental import pallas as pl
from jax.experimental.pallas import tpu as pltpu

INPUT_SIZE = 2
HIDDEN_SIZE = 128
N_HIDDEN_LAYERS = 3
OUT_SIZE = 28 * 28  # 784


def _round_up(n, m):
    return ((n + m - 1) // m) * m


def _mlp_kernel(x_ref,
                w1_ref, b1_ref,
                w2_ref, b2_ref,
                w3_ref, b3_ref,
                w4_ref, b4_ref,
                out_ref, acts_ref):
    """One batch tile: 3x(Linear+ReLU) + final Linear, weights VMEM-resident."""
    x = x_ref[...]                                   # (TB, 2)  f32
    w1 = w1_ref[...]                                 # (2, 128) f32

    # Layer 1: K=2 contraction as two broadcast multiply-adds on the VPU
    # (avoids burning an MXU pass on a 2->128 padded contraction).
    h1 = x[:, 0:1] * w1[0:1, :] + x[:, 1:2] * w1[1:2, :] + b1_ref[...]
    h1 = jnp.maximum(h1, 0.0)
    acts_ref[0] = h1                                 # (TB, 128) lane-dense store

    h2 = jnp.dot(h1.astype(w2_ref.dtype), w2_ref[...],
                 preferred_element_type=jnp.float32) + b2_ref[...]
    h2 = jnp.maximum(h2, 0.0)
    acts_ref[1] = h2

    h3 = jnp.dot(h2.astype(w3_ref.dtype), w3_ref[...],
                 preferred_element_type=jnp.float32) + b3_ref[...]
    h3 = jnp.maximum(h3, 0.0)
    acts_ref[2] = h3

    # Final layer: native 784-wide store (6 dense 128-lane groups + 1 masked).
    out_ref[...] = (jnp.dot(h3.astype(w4_ref.dtype), w4_ref[...],
                            preferred_element_type=jnp.float32) + b4_ref[...])


def prepare_params(params, weights_dtype=jnp.float32):
    """One-time weight prep (hoisted out of the forward path).

    Layer 1 stays f32 (it runs on the VPU); layers 2-4 may be cast to bf16 for
    the MXU (f32 accumulation in-kernel). Biases stay f32.
    """
    (w1, b1), (w2, b2), (w3, b3), (w4, b4) = params
    return [(w1, b1),
            (w2.astype(weights_dtype), b2),
            (w3.astype(weights_dtype), b3),
            (w4.astype(weights_dtype), b4)]


def mlp_decoder_forward(x, params, *, block_b=1024,
                        vmem_limit_bytes=32 * 1024 * 1024):
    """Run the fused MLP decoder kernel.

    Args:
      x: (B, 2) float32.
      params: list of (W_t, b) pairs (output of prepare_params); W_t (in, out),
        b (1, out). Layer-1 weight must be f32.
      block_b: batch-tile upper bound (multiple of 8). Sweep up to ~2048 on v7x
        (64 MiB VMEM) / ~4096 on v5e/v6e with a larger vmem_limit_bytes.
      vmem_limit_bytes: Mosaic scoped-VMEM limit.

    Returns:
      image:       (B, 1, 28, 28) float32
      activations: list of 3 arrays, each (B, 128, 1, 1) float32
    """
    B = x.shape[0]
    (w1, b1), (w2, b2), (w3, b3), (w4, b4) = params

    # Batch tile: multiple of 8 sublanes.
    TB = min(block_b, _round_up(B, 8))
    # v7x: make sure there are >= 2 grid steps so both TensorCores get work.
    if _round_up(B, TB) // TB < 2:
        half = _round_up(-(-_round_up(B, 8) // 2), 8)
        if 8 <= half < TB:
            TB = half
    Bp = _round_up(B, TB)
    if Bp != B:
        x = jnp.pad(x, ((0, Bp - B), (0, 0)))
    grid = (Bp // TB,)

    def _tiled2d(feat):
        return pl.BlockSpec((TB, feat), lambda i: (i, 0))

    def _resident(arr):
        return pl.BlockSpec(arr.shape, lambda i: (0, 0))

    in_specs = [
        _tiled2d(INPUT_SIZE),
        _resident(w1), _resident(b1),
        _resident(w2), _resident(b2),
        _resident(w3), _resident(b3),
        _resident(w4), _resident(b4),
    ]
    out_specs = (
        pl.BlockSpec((TB, OUT_SIZE), lambda i: (i, 0)),
        pl.BlockSpec((N_HIDDEN_LAYERS, TB, HIDDEN_SIZE), lambda i: (0, i, 0)),
    )
    out_shapes = (
        jax.ShapeDtypeStruct((Bp, OUT_SIZE), jnp.float32),
        jax.ShapeDtypeStruct((N_HIDDEN_LAYERS, Bp, HIDDEN_SIZE), jnp.float32),
    )

    weight_bytes = sum(int(np.prod(a.shape)) * a.dtype.itemsize
                       for a in (w1, b1, w2, b2, w3, b3, w4, b4))
    flops = 2 * Bp * (INPUT_SIZE * HIDDEN_SIZE
                      + 2 * HIDDEN_SIZE * HIDDEN_SIZE
                      + HIDDEN_SIZE * OUT_SIZE)
    bytes_accessed = (Bp * INPUT_SIZE * 4
                      + weight_bytes
                      + Bp * (OUT_SIZE + N_HIDDEN_LAYERS * HIDDEN_SIZE) * 4)

    out_p, acts_p = pl.pallas_call(
        _mlp_kernel,
        out_shape=out_shapes,
        grid=grid,
        in_specs=in_specs,
        out_specs=out_specs,
        compiler_params=pltpu.CompilerParams(
            dimension_semantics=("parallel",),
            vmem_limit_bytes=vmem_limit_bytes),
        cost_estimate=pl.CostEstimate(flops=flops, transcendentals=0,
                                      bytes_accessed=bytes_accessed),
    )(x, w1, b1, w2, b2, w3, b3, w4, b4)

    image = out_p[:B].reshape(B, 1, 28, 28)
    activations = [acts_p[l, :B].reshape(B, HIDDEN_SIZE, 1, 1)
                   for l in range(N_HIDDEN_LAYERS)]
    return image, activations


def init_params(key):
    """nn.Linear-style init (uniform +-1/sqrt(fan_in)); weights stored (in, out)."""
    dims = [INPUT_SIZE] + [HIDDEN_SIZE] * N_HIDDEN_LAYERS + [OUT_SIZE]
    params = []
    for i in range(len(dims) - 1):
        in_dim, out_dim = dims[i], dims[i + 1]
        key, kw, kb = jax.random.split(key, 3)
        bound = 1.0 / math.sqrt(in_dim)
        w_t = jax.random.uniform(kw, (in_dim, out_dim), jnp.float32, -bound, bound)
        b = jax.random.uniform(kb, (1, out_dim), jnp.float32, -bound, bound)
        params.append((w_t, b))
    return params


def _reference_forward(x, params):
    """Plain-JAX reference mirroring the PyTorch forward (same weight dtypes)."""
    out = x
    acts = []
    for i, (w, b) in enumerate(params):
        if i == 0:
            out = out @ w + b
        else:
            out = jnp.dot(out.astype(w.dtype), w,
                          preferred_element_type=jnp.float32) + b
        if i < len(params) - 1:
            out = jnp.maximum(out, 0.0)
            acts.append(out[..., None, None])
    return out.reshape(x.shape[0], 1, 28, 28), acts


if __name__ == "__main__":
    key = jax.random.PRNGKey(0)
    key, kx = jax.random.split(key)

    B = 8
    x = jax.random.normal(kx, (B, INPUT_SIZE), dtype=jnp.float32)
    raw_params = init_params(key)

    fwd = jax.jit(mlp_decoder_forward)

    # --- f32 path (matches the PyTorch module) -----------------------------
    params_f32 = prepare_params(raw_params, jnp.float32)
    image, activations = fwd(x, params_f32)
    image = jax.block_until_ready(image)
    activations = [jax.block_until_ready(a) for a in activations]

    ref_image, ref_acts = _reference_forward(x, params_f32)
    np.testing.assert_allclose(np.asarray(image), np.asarray(ref_image),
                               rtol=1e-4, atol=1e-4)
    assert image.shape == (B, 1, 28, 28)
    assert len(activations) == N_HIDDEN_LAYERS
    for a, ra in zip(activations, ref_acts):
        assert a.shape == (B, HIDDEN_SIZE, 1, 1)
        np.testing.assert_allclose(np.asarray(a), np.asarray(ra),
                                   rtol=1e-4, atol=1e-4)

    # --- bf16-weight path (recommended on v5e), f32 accumulation -----------
    params_bf16 = prepare_params(raw_params, jnp.bfloat16)
    image_bf, acts_bf = fwd(x, params_bf16)
    image_bf = jax.block_until_ready(image_bf)
    ref_image_bf, ref_acts_bf = _reference_forward(x, params_bf16)
    np.testing.assert_allclose(np.asarray(image_bf), np.asarray(ref_image_bf),
                               rtol=2e-2, atol=2e-2)
    for a, ra in zip(acts_bf, ref_acts_bf):
        np.testing.assert_allclose(np.asarray(a), np.asarray(ra),
                                   rtol=2e-2, atol=2e-2)

    # --- batch not a multiple of the tile (padding + 2-step grid path) -----
    B2 = 13
    x2 = jax.random.normal(jax.random.PRNGKey(1), (B2, INPUT_SIZE),
                           dtype=jnp.float32)
    image2, acts2 = fwd(x2, params_f32)
    image2 = jax.block_until_ready(image2)
    ref_image2, ref_acts2 = _reference_forward(x2, params_f32)
    np.testing.assert_allclose(np.asarray(image2), np.asarray(ref_image2),
                               rtol=1e-4, atol=1e-4)
    for a, ra in zip(acts2, ref_acts2):
        np.testing.assert_allclose(np.asarray(a), np.asarray(ra),
                                   rtol=1e-4, atol=1e-4)

    print("KERNEL_OK")
</pallas_src>

<mosaic_0001>
module attributes {stable_mosaic.version = 11 : i64} {
  func.func @_mlp_kernel(%arg0: i32, %arg1: memref<8x2xf32, #tpu.memory_space<vmem>>, %arg2: memref<2x128xf32, #tpu.memory_space<vmem>>, %arg3: memref<1x128xf32, #tpu.memory_space<vmem>>, %arg4: memref<128x128xf32, #tpu.memory_space<vmem>>, %arg5: memref<1x128xf32, #tpu.memory_space<vmem>>, %arg6: memref<128x128xf32, #tpu.memory_space<vmem>>, %arg7: memref<1x128xf32, #tpu.memory_space<vmem>>, %arg8: memref<128x784xf32, #tpu.memory_space<vmem>>, %arg9: memref<1x784xf32, #tpu.memory_space<vmem>>, %arg10: memref<8x784xf32, #tpu.memory_space<vmem>>, %arg11: memref<3x8x128xf32, #tpu.memory_space<vmem>>) attributes {dimension_semantics = [#tpu.dimension_semantics<parallel>], iteration_bounds = array<i64: 1>, scalar_prefetch = 0 : i64, scratch_operands = 0 : i64, tpu.core_type = #tpu.core_type<tc>, window_params = [{transform_indices = @transform_0, window_bounds = array<i64: 8, 2>}, {pipeline_mode = #tpu.pipeline_mode<synchronous>, transform_indices = @transform_1, window_bounds = array<i64: 2, 128>}, {pipeline_mode = #tpu.pipeline_mode<synchronous>, transform_indices = @transform_2, window_bounds = array<i64: 1, 128>}, {pipeline_mode = #tpu.pipeline_mode<synchronous>, transform_indices = @transform_3, window_bounds = array<i64: 128, 128>}, {pipeline_mode = #tpu.pipeline_mode<synchronous>, transform_indices = @transform_4, window_bounds = array<i64: 1, 128>}, {pipeline_mode = #tpu.pipeline_mode<synchronous>, transform_indices = @transform_5, window_bounds = array<i64: 128, 128>}, {pipeline_mode = #tpu.pipeline_mode<synchronous>, transform_indices = @transform_6, window_bounds = array<i64: 1, 128>}, {pipeline_mode = #tpu.pipeline_mode<synchronous>, transform_indices = @transform_7, window_bounds = array<i64: 128, 784>}, {pipeline_mode = #tpu.pipeline_mode<synchronous>, transform_indices = @transform_8, window_bounds = array<i64: 1, 784>}, {transform_indices = @transform_9, window_bounds = array<i64: 8, 784>}, {transform_indices = @transform_10, window_bounds = array<i64: 3, 8, 128>}]} {
    %c0 = arith.constant 0 : index
    %c0_0 = arith.constant 0 : index
    %0 = vector.load %arg1[%c0, %c0_0] : memref<8x2xf32, #tpu.memory_space<vmem>>, vector<8x2xf32>
    %c0_1 = arith.constant 0 : index
    %c0_2 = arith.constant 0 : index
    %1 = vector.load %arg2[%c0_1, %c0_2] : memref<2x128xf32, #tpu.memory_space<vmem>>, vector<2x128xf32>
    %2 = vector.extract_strided_slice %0 {offsets = [0, 0], sizes = [8, 1], strides = [1, 1]} : vector<8x2xf32> to vector<8x1xf32>
    %3 = vector.extract_strided_slice %1 {offsets = [0, 0], sizes = [1, 128], strides = [1, 1]} : vector<2x128xf32> to vector<1x128xf32>
    %4 = vector.broadcast %2 : vector<8x1xf32> to vector<8x128xf32>
    %5 = vector.broadcast %3 : vector<1x128xf32> to vector<8x128xf32>
    %6 = arith.mulf %4, %5 : vector<8x128xf32>
    %7 = vector.extract_strided_slice %0 {offsets = [0, 1], sizes = [8, 1], strides = [1, 1]} : vector<8x2xf32> to vector<8x1xf32>
    %8 = vector.extract_strided_slice %1 {offsets = [1, 0], sizes = [1, 128], strides = [1, 1]} : vector<2x128xf32> to vector<1x128xf32>
    %9 = vector.broadcast %7 : vector<8x1xf32> to vector<8x128xf32>
    %10 = vector.broadcast %8 : vector<1x128xf32> to vector<8x128xf32>
    %11 = arith.mulf %9, %10 : vector<8x128xf32>
    %12 = arith.addf %6, %11 : vector<8x128xf32>
    %c0_3 = arith.constant 0 : index
    %c0_4 = arith.constant 0 : index
    %13 = vector.load %arg3[%c0_3, %c0_4] : memref<1x128xf32, #tpu.memory_space<vmem>>, vector<1x128xf32>
    %14 = vector.broadcast %13 : vector<1x128xf32> to vector<8x128xf32>
    %15 = arith.addf %12, %14 : vector<8x128xf32>
    %cst = arith.constant 0.000000e+00 : f32
    %16 = vector.broadcast %cst : f32 to vector<8x128xf32>
    %17 = arith.maximumf %15, %16 : vector<8x128xf32>
    %c0_5 = arith.constant 0 : index
    %c0_6 = arith.constant 0 : index
    %c0_7 = arith.constant 0 : index
    %18 = vector.load %arg11[%c0_5, %c0_6, %c0_7] : memref<3x8x128xf32, #tpu.memory_space<vmem>>, vector<1x8x128xf32>
    %19 = vector.shape_cast %18 : vector<1x8x128xf32> to vector<8x128xf32>
    %20 = vector.shape_cast %17 : vector<8x128xf32> to vector<1x8x128xf32>
    tpu.vector_store %arg11[%c0_5, %c0_6, %c0_7], %20 {strides = array<i32>} : memref<3x8x128xf32, #tpu.memory_space<vmem>>, vector<1x8x128xf32>,
    %c0_8 = arith.constant 0 : index
    %c0_9 = arith.constant 0 : index
    %21 = vector.load %arg4[%c0_8, %c0_9] : memref<128x128xf32, #tpu.memory_space<vmem>>, vector<128x128xf32>
    %cst_10 = arith.constant dense<0.000000e+00> : vector<8x128xf32>
    %22 = tpu.matmul %17, %21, %cst_10 {dimension_numbers = #tpu.dot_dimension_numbers<[1], [0], [0], [1], [0, 0, 1, 1], [], []>} : vector<8x128xf32>, vector<128x128xf32>, vector<8x128xf32> -> vector<8x128xf32>
    %c0_11 = arith.constant 0 : index
    %c0_12 = arith.constant 0 : index
    %23 = vector.load %arg5[%c0_11, %c0_12] : memref<1x128xf32, #tpu.memory_space<vmem>>, vector<1x128xf32>
    %24 = vector.broadcast %23 : vector<1x128xf32> to vector<8x128xf32>
    %25 = arith.addf %22, %24 : vector<8x128xf32>
    %cst_13 = arith.constant 0.000000e+00 : f32
    %26 = vector.broadcast %cst_13 : f32 to vector<8x128xf32>
    %27 = arith.maximumf %25, %26 : vector<8x128xf32>
    %c1 = arith.constant 1 : index
    %c0_14 = arith.constant 0 : index
    %c0_15 = arith.constant 0 : index
    %28 = vector.load %arg11[%c1, %c0_14, %c0_15] : memref<3x8x128xf32, #tpu.memory_space<vmem>>, vector<1x8x128xf32>
    %29 = vector.shape_cast %28 : vector<1x8x128xf32> to vector<8x128xf32>
    %30 = vector.shape_cast %27 : vector<8x128xf32> to vector<1x8x128xf32>
    tpu.vector_store %arg11[%c1, %c0_14, %c0_15], %30 {strides = array<i32>} : memref<3x8x128xf32, #tpu.memory_space<vmem>>, vector<1x8x128xf32>,
    %c0_16 = arith.constant 0 : index
    %c0_17 = arith.constant 0 : index
    %31 = vector.load %arg6[%c0_16, %c0_17] : memref<128x128xf32, #tpu.memory_space<vmem>>, vector<128x128xf32>
    %cst_18 = arith.constant dense<0.000000e+00> : vector<8x128xf32>
    %32 = tpu.matmul %27, %31, %cst_18 {dimension_numbers = #tpu.dot_dimension_numbers<[1], [0], [0], [1], [0, 0, 1, 1], [], []>} : vector<8x128xf32>, vector<128x128xf32>, vector<8x128xf32> -> vector<8x128xf32>
    %c0_19 = arith.constant 0 : index
    %c0_20 = arith.constant 0 : index
    %33 = vector.load %arg7[%c0_19, %c0_20] : memref<1x128xf32, #tpu.memory_space<vmem>>, vector<1x128xf32>
    %34 = vector.broadcast %33 : vector<1x128xf32> to vector<8x128xf32>
    %35 = arith.addf %32, %34 : vector<8x128xf32>
    %cst_21 = arith.constant 0.000000e+00 : f32
    %36 = vector.broadcast %cst_21 : f32 to vector<8x128xf32>
    %37 = arith.maximumf %35, %36 : vector<8x128xf32>
    %c2 = arith.constant 2 : index
    %c0_22 = arith.constant 0 : index
    %c0_23 = arith.constant 0 : index
    %38 = vector.load %arg11[%c2, %c0_22, %c0_23] : memref<3x8x128xf32, #tpu.memory_space<vmem>>, vector<1x8x128xf32>
    %39 = vector.shape_cast %38 : vector<1x8x128xf32> to vector<8x128xf32>
    %40 = vector.shape_cast %37 : vector<8x128xf32> to vector<1x8x128xf32>
    tpu.vector_store %arg11[%c2, %c0_22, %c0_23], %40 {strides = array<i32>} : memref<3x8x128xf32, #tpu.memory_space<vmem>>, vector<1x8x128xf32>,
    %c0_24 = arith.constant 0 : index
    %c0_25 = arith.constant 0 : index
    %41 = vector.load %arg8[%c0_24, %c0_25] : memref<128x784xf32, #tpu.memory_space<vmem>>, vector<128x784xf32>
    %cst_26 = arith.constant dense<0.000000e+00> : vector<8x784xf32>
    %42 = tpu.matmul %37, %41, %cst_26 {dimension_numbers = #tpu.dot_dimension_numbers<[1], [0], [0], [1], [0, 0, 1, 1], [], []>} : vector<8x128xf32>, vector<128x784xf32>, vector<8x784xf32> -> vector<8x784xf32>
    %c0_27 = arith.constant 0 : index
    %c0_28 = arith.constant 0 : index
    %43 = vector.load %arg9[%c0_27, %c0_28] : memref<1x784xf32, #tpu.memory_space<vmem>>, vector<1x784xf32>
    %44 = vector.broadcast %43 : vector<1x784xf32> to vector<8x784xf32>
    %45 = arith.addf %42, %44 : vector<8x784xf32>
    %c0_29 = arith.constant 0 : index
    %c0_30 = arith.constant 0 : index
    %46 = vector.load %arg10[%c0_29, %c0_30] : memref<8x784xf32, #tpu.memory_space<vmem>>, vector<8x784xf32>
    tpu.vector_store %arg10[%c0_29, %c0_30], %45 {strides = array<i32>} : memref<8x784xf32, #tpu.memory_space<vmem>>, vector<8x784xf32>,
    return
  }
  func.func @transform_0(%arg0: i32) -> (i32, i32) {
    %c0_i32 = arith.constant 0 : i32
    %c0_i32_0 = arith.constant 0 : i32
    return %arg0, %c0_i32 : i32, i32
  }
  func.func @transform_1(%arg0: i32) -> (i32, i32) {
    %c0_i32 = arith.constant 0 : i32
    %c0_i32_0 = arith.constant 0 : i32
    %c0_i32_1 = arith.constant 0 : i32
    return %c0_i32, %c0_i32_0 : i32, i32
  }
  func.func @transform_2(%arg0: i32) -> (i32, i32) {
    %c0_i32 = arith.constant 0 : i32
    %c0_i32_0 = arith.constant 0 : i32
    %c0_i32_1 = arith.constant 0 : i32
    return %c0_i32, %c0_i32_0 : i32, i32
  }
  func.func @transform_3(%arg0: i32) -> (i32, i32) {
    %c0_i32 = arith.constant 0 : i32
    %c0_i32_0 = arith.constant 0 : i32
    %c0_i32_1 = arith.constant 0 : i32
    return %c0_i32, %c0_i32_0 : i32, i32
  }
  func.func @transform_4(%arg0: i32) -> (i32, i32) {
    %c0_i32 = arith.constant 0 : i32
    %c0_i32_0 = arith.constant 0 : i32
    %c0_i32_1 = arith.constant 0 : i32
    return %c0_i32, %c0_i32_0 : i32, i32
  }
  func.func @transform_5(%arg0: i32) -> (i32, i32) {
    %c0_i32 = arith.constant 0 : i32
    %c0_i32_0 = arith.constant 0 : i32
    %c0_i32_1 = arith.constant 0 : i32
    return %c0_i32, %c0_i32_0 : i32, i32
  }
  func.func @transform_6(%arg0: i32) -> (i32, i32) {
    %c0_i32 = arith.constant 0 : i32
    %c0_i32_0 = arith.constant 0 : i32
    %c0_i32_1 = arith.constant 0 : i32
    return %c0_i32, %c0_i32_0 : i32, i32
  }
  func.func @transform_7(%arg0: i32) -> (i32, i32) {
    %c0_i32 = arith.constant 0 : i32
    %c0_i32_0 = arith.constant 0 : i32
    %c0_i32_1 = arith.constant 0 : i32
    return %c0_i32, %c0_i32_0 : i32, i32
  }
  func.func @transform_8(%arg0: i32) -> (i32, i32) {
    %c0_i32 = arith.constant 0 : i32
    %c0_i32_0 = arith.constant 0 : i32
    %c0_i32_1 = arith.constant 0 : i32
    return %c0_i32, %c0_i32_0 : i32, i32
  }
  func.func @transform_9(%arg0: i32) -> (i32, i32) {
    %c0_i32 = arith.constant 0 : i32
    %c0_i32_0 = arith.constant 0 : i32
    return %arg0, %c0_i32 : i32, i32
  }
  func.func @transform_10(%arg0: i32) -> (i32, i32, i32) {
    %c0_i32 = arith.constant 0 : i32
    %c0_i32_0 = arith.constant 0 : i32
    %c0_i32_1 = arith.constant 0 : i32
    return %c0_i32, %arg0, %c0_i32_0 : i32, i32, i32
  }
}

</mosaic_0001>

<llo_original>
// kernel: mlp_decoder_forward.1
$region0: #{mlp_decoder_forward.1}
  #allocation0 [shape = 'u32[]', space=smem, size = 0x4, offset = 0x4, fixed_abs, tag = 'smem constant byte address 0x4 - core index']
  #allocation1 [shape = 'u32[72,128]{1,0:T(1,128)}', space=vmem, size = 0x9000, scoped, tag = 'internal scratch']
  %s0 = inlined_call_operand.vmem [shape: f32[8,2], index: 0, kind: input, shape index: {}]
  %s1 = inlined_call_operand.vmem [shape: f32[2,128], index: 1, kind: input, shape index: {}]
  %s2 = inlined_call_operand.vmem [shape: f32[1,128], index: 2, kind: input, shape index: {}]
  %s3 = inlined_call_operand.vmem [shape: f32[128,128], index: 3, kind: input, shape index: {}]
  %s4 = inlined_call_operand.vmem [shape: f32[1,128], index: 4, kind: input, shape index: {}]
  %s5 = inlined_call_operand.vmem [shape: f32[128,128], index: 5, kind: input, shape index: {}]
  %s6 = inlined_call_operand.vmem [shape: f32[1,128], index: 6, kind: input, shape index: {}]
  %s7 = inlined_call_operand.vmem [shape: f32[128,784], index: 7, kind: input, shape index: {}]
  %s8 = inlined_call_operand.vmem [shape: f32[1,784], index: 8, kind: input, shape index: {}]
  %s9 = inlined_call_operand.vmem [shape: f32[8,784], index: 9, kind: output, shape index: {0}]
  %s10 = inlined_call_operand.vmem [shape: f32[3,8,128], index: 10, kind: output, shape index: {1}]
  %11 = xla_tuple %s9, %s10
  %s12 = sld [smem:[#allocation0]]
  $region54: #{mlp_decoder_forward.1} parent=0
    _
  %s14 = ssub.s32 1, %s12
  %s15 = scalar_select 0, %s14, %s12
  // Predicated region
  $region2: #{mlp_decoder_forward.1} parent=0 // pred_check
    _
  $region3: #{mlp_decoder_forward.1} parent=0 // pred_check_branch
    %17 = sbr.rel (0) target = $region5
  $region4: #{mlp_decoder_forward.1} parent=0 // pred_region
    _
  $region5: #{mlp_decoder_forward.1} parent=0 // pred_fallthru
    _
  // Predicated region
  $region6: #{mlp_decoder_forward.1} parent=0 // pred_check
    _
  $region7: #{mlp_decoder_forward.1} parent=0 // pred_check_branch
    %19 = sbr.rel (0) target = $region9
  $region8: #{mlp_decoder_forward.1} parent=0 // pred_region
    _
  $region9: #{mlp_decoder_forward.1} parent=0 // pred_fallthru
    _
  // Predicated region
  $region10: #{mlp_decoder_forward.1} parent=0 // pred_check
    _
  $region11: #{mlp_decoder_forward.1} parent=0 // pred_check_branch
    %21 = sbr.rel (0) target = $region13
  $region12: #{mlp_decoder_forward.1} parent=0 // pred_region
    _
  $region13: #{mlp_decoder_forward.1} parent=0 // pred_fallthru
    _
  // Predicated region
  $region14: #{mlp_decoder_forward.1} parent=0 // pred_check
    _
  $region15: #{mlp_decoder_forward.1} parent=0 // pred_check_branch
    %23 = sbr.rel (0) target = $region17
  $region16: #{mlp_decoder_forward.1} parent=0 // pred_region
    _
  $region17: #{mlp_decoder_forward.1} parent=0 // pred_fallthru
    _
  // Predicated region
  $region18: #{mlp_decoder_forward.1} parent=0 // pred_check
    _
  $region19: #{mlp_decoder_forward.1} parent=0 // pred_check_branch
    %25 = sbr.rel (0) target = $region21
  $region20: #{mlp_decoder_forward.1} parent=0 // pred_region
    _
  $region21: #{mlp_decoder_forward.1} parent=0 // pred_fallthru
    _
  // Predicated region
  $region22: #{mlp_decoder_forward.1} parent=0 // pred_check
    _
  $region23: #{mlp_decoder_forward.1} parent=0 // pred_check_branch
    %27 = sbr.rel (0) target = $region25
  $region24: #{mlp_decoder_forward.1} parent=0 // pred_region
    _
  $region25: #{mlp_decoder_forward.1} parent=0 // pred_fallthru
    _
  // Predicated region
  $region26: #{mlp_decoder_forward.1} parent=0 // pred_check
    _
  $region27: #{mlp_decoder_forward.1} parent=0 // pred_check_branch
    %29 = sbr.rel (0) target = $region29
  $region28: #{mlp_decoder_forward.1} parent=0 // pred_region
    _
  $region29: #{mlp_decoder_forward.1} parent=0 // pred_fallthru
    _
  // Predicated region
  $region30: #{mlp_decoder_forward.1} parent=0 // pred_check
    _
  $region31: #{mlp_decoder_forward.1} parent=0 // pred_check_branch
    %31 = sbr.rel (0) target = $region33
  $region32: #{mlp_decoder_forward.1} parent=0 // pred_region
    _
  $region33: #{mlp_decoder_forward.1} parent=0 // pred_fallthru
    _
  // Predicated region
  $region34: #{mlp_decoder_forward.1} parent=0 // pred_check
    _
  $region35: #{mlp_decoder_forward.1} parent=0 // pred_check_branch
    %33 = sbr.rel (0) target = $region37
  $region36: #{mlp_decoder_forward.1} parent=0 // pred_region
    _
  $region37: #{mlp_decoder_forward.1} parent=0 // pred_fallthru
    _
  %v34 = vld [vmem:[%s0] sm:$0xff]
  %v35 = vld [vmem:[%s1] sm:$0x3]
  %37 = vset.pattern.permute.xlu0 0
  %38 = vperm.xlu0 %37, %v34
  %v39 = vpop.permute.xlu0 %38
  %v41 = vperm.slane %v35, 0
  %v42 = vmul.f32 %v39, %v41
  %43 = vset.pattern.permute.xlu0 1
  %44 = vperm.xlu0 %43, %v34
  %v45 = vpop.permute.xlu0 %44
  %v47 = vperm.slane %v35, 1
  %v48 = vmul.f32 %v45, %v47
  %v49 = vadd.f32 %v42, %v48
  %v50 = vld [vmem:[%s2] sm:$0x1]
  %v52 = vperm.slane %v50, 0
  %v54 = vadd.f32 %v49, %v52
  %v55 = vmax.f32 %v54, 0.0
  %56 = vst [vmem:[%s10] sm:$0xff] %v55
  %v57 = vld [vmem:[%s3] sm:$0xff]
  %v58 = vld [vmem:[%s3 + $0x8] sm:$0xff]
  %v59 = vld [vmem:[%s3 + $0x10] sm:$0xff]
  %v60 = vld [vmem:[%s3 + $0x18] sm:$0xff]
  %v61 = vld [vmem:[%s3 + $0x20] sm:$0xff]
  %v62 = vld [vmem:[%s3 + $0x28] sm:$0xff]
  %v63 = vld [vmem:[%s3 + $0x30] sm:$0xff]
  %v64 = vld [vmem:[%s3 + $0x38] sm:$0xff]
  %v65 = vld [vmem:[%s3 + $0x40] sm:$0xff]
  %v66 = vld [vmem:[%s3 + $0x48] sm:$0xff]
  %v67 = vld [vmem:[%s3 + $0x50] sm:$0xff]
  %v68 = vld [vmem:[%s3 + $0x58] sm:$0xff]
  %v69 = vld [vmem:[%s3 + $0x60] sm:$0xff]
  %v70 = vld [vmem:[%s3 + $0x68] sm:$0xff]
  %v71 = vld [vmem:[%s3 + $0x70] sm:$0xff]
  %v72 = vld [vmem:[%s3 + $0x78] sm:$0xff]
  %v73 = vld [vmem:[%s4] sm:$0x1]
  %v75 = vperm.slane %v73, 0
  %77 = vmatpush.msra.mxu0 %v72
  %78 = vmatpush.msra.mxu0 %v71
  %79 = vmatpush.msra.mxu0 %v70
  %80 = vmatpush.msra.mxu0 %v69
  %81 = vmatpush.msra.mxu0 %v68
  %82 = vmatpush.msra.mxu0 %v67
  %83 = vmatpush.msra.mxu0 %v66
  %84 = vmatpush.msra.mxu0 %v65
  %85 = vmatpush.msra.mxu0 %v64
  %86 = vmatpush.msra.mxu0 %v63
  %87 = vmatpush.msra.mxu0 %v62
  %88 = vmatpush.msra.mxu0 %v61
  %89 = vmatpush.msra.mxu0 %v60
  %90 = vmatpush.msra.mxu0 %v59
  %91 = vmatpush.msra.mxu0 %v58
  %92 = vmatpush.msra.mxu0 %v57
  %93 = vmatmul.f32.gmra.mxu0 %v55
  %v94 = vpop.f32.mrf.mxu0
  %v95 = vadd.f32 %v75, %v94
  %96 = vdwg.mxu0
  %v97 = vmax.f32 %v95, 0.0
  %s98 = scalar_lea.vmem %s10, 8
  %99 = vst [vmem:[%s98] sm:$0xff] %v97
  %v100 = vld [vmem:[%s5] sm:$0xff]
  %v101 = vld [vmem:[%s5 + $0x8] sm:$0xff]
  %v102 = vld [vmem:[%s5 + $0x10] sm:$0xff]
  %v103 = vld [vmem:[%s5 + $0x18] sm:$0xff]
  %v104 = vld [vmem:[%s5 + $0x20] sm:$0xff]
  %v105 = vld [vmem:[%s5 + $0x28] sm:$0xff]
  %v106 = vld [vmem:[%s5 + $0x30] sm:$0xff]
  %v107 = vld [vmem:[%s5 + $0x38] sm:$0xff]
  %v108 = vld [vmem:[%s5 + $0x40] sm:$0xff]
  %v109 = vld [vmem:[%s5 + $0x48] sm:$0xff]
  %v110 = vld [vmem:[%s5 + $0x50] sm:$0xff]
  %v111 = vld [vmem:[%s5 + $0x58] sm:$0xff]
  %v112 = vld [vmem:[%s5 + $0x60] sm:$0xff]
  %v113 = vld [vmem:[%s5 + $0x68] sm:$0xff]
  %v114 = vld [vmem:[%s5 + $0x70] sm:$0xff]
  %v115 = vld [vmem:[%s5 + $0x78] sm:$0xff]
  %v116 = vld [vmem:[%s6] sm:$0x1]
  %v118 = vperm.slane %v116, 0
  %120 = vmatpush.msra.mxu0 %v115
  %121 = vmatpush.msra.mxu0 %v114
  %122 = vmatpush.msra.mxu0 %v113
  %123 = vmatpush.msra.mxu0 %v112
  %124 = vmatpush.msra.mxu0 %v111
  %125 = vmatpush.msra.mxu0 %v110
  %126 = vmatpush.msra.mxu0 %v109
  %127 = vmatpush.msra.mxu0 %v108
  %128 = vmatpush.msra.mxu0 %v107
  %129 = vmatpush.msra.mxu0 %v106
  %130 = vmatpush.msra.mxu0 %v105
  %131 = vmatpush.msra.mxu0 %v104
  %132 = vmatpush.msra.mxu0 %v103
  %133 = vmatpush.msra.mxu0 %v102
  %134 = vmatpush.msra.mxu0 %v101
  %135 = vmatpush.msra.mxu0 %v100
  %136 = vmatmul.f32.gmra.mxu0 %v97
  %v137 = vpop.f32.mrf.mxu0
  %v138 = vadd.f32 %v118, %v137
  %139 = vdwg.mxu0
  %v140 = vmax.f32 %v138, 0.0
  %s141 = scalar_lea.vmem %s10, 16
  %142 = vst [vmem:[%s141] sm:$0xff] %v140
  %v143 = vld [vmem:[%s7] sm:$0xff]
  %v144 = vld [vmem:[%s7 + $0x8] sm:$0xff]
  %v145 = vld [vmem:[%s7 + $0x10] sm:$0xff]
  %v146 = vld [vmem:[%s7 + $0x18] sm:$0xff]
  %v147 = vld [vmem:[%s7 + $0x20] sm:$0xff]
  %v148 = vld [vmem:[%s7 + $0x28] sm:$0xff]
  %v149 = vld [vmem:[%s7 + $0x30] sm:$0xff]
  %v150 = vld [vmem:[%s7 + $0x38] sm:$0xff]
  %v151 = vld [vmem:[%s7 + $0x40] sm:$0xff]
  %v152 = vld [vmem:[%s7 + $0x48] sm:$0xff]
  %v153 = vld [vmem:[%s7 + $0x50] sm:$0xff]
  %v154 = vld [vmem:[%s7 + $0x58] sm:$0xff]
  %v155 = vld [vmem:[%s7 + $0x60] sm:$0xff]
  %v156 = vld [vmem:[%s7 + $0x68] sm:$0xff]
  %v157 = vld [vmem:[%s7 + $0x70] sm:$0xff]
  %v158 = vld [vmem:[%s7 + $0x78] sm:$0xff]
  %v159 = vld [vmem:[%s7 + $0x80] sm:$0xff]
  %v160 = vld [vmem:[%s7 + $0x88] sm:$0xff]
  %v161 = vld [vmem:[%s7 + $0x90] sm:$0xff]
  %v162 = vld [vmem:[%s7 + $0x98] sm:$0xff]
  %v163 = vld [vmem:[%s7 + $0xa0] sm:$0xff]
  %v164 = vld [vmem:[%s7 + $0xa8] sm:$0xff]
  %v165 = vld [vmem:[%s7 + $0xb0] sm:$0xff]
  %v166 = vld [vmem:[%s7 + $0xb8] sm:$0xff]
  %v167 = vld [vmem:[%s7 + $0xc0] sm:$0xff]
  %v168 = vld [vmem:[%s7 + $0xc8] sm:$0xff]
  %v169 = vld [vmem:[%s7 + $0xd0] sm:$0xff]
  %v170 = vld [vmem:[%s7 + $0xd8] sm:$0xff]
  %v171 = vld [vmem:[%s7 + $0xe0] sm:$0xff]
  %v172 = vld [vmem:[%s7 + $0xe8] sm:$0xff]
  %v173 = vld [vmem:[%s7 + $0xf0] sm:$0xff]
  %v174 = vld [vmem:[%s7 + $0xf8] sm:$0xff]
  %v175 = vld [vmem:[%s7 + $0x100] sm:$0xff]
  %v176 = vld [vmem:[%s7 + $0x108] sm:$0xff]
  %v177 = vld [vmem:[%s7 + $0x110] sm:$0xff]
  %v178 = vld [vmem:[%s7 + $0x118] sm:$0xff]
  %v179 = vld [vmem:[%s7 + $0x120] sm:$0xff]
  %v180 = vld [vmem:[%s7 + $0x128] sm:$0xff]
  %v181 = vld [vmem:[%s7 + $0x130] sm:$0xff]
  %v182 = vld [vmem:[%s7 + $0x138] sm:$0xff]
  %v183 = vld [vmem:[%s7 + $0x140] sm:$0xff]
  %v184 = vld [vmem:[%s7 + $0x148] sm:$0xff]
  %v185 = vld [vmem:[%s7 + $0x150] sm:$0xff]
  %v186 = vld [vmem:[%s7 + $0x158] sm:$0xff]
  %v187 = vld [vmem:[%s7 + $0x160] sm:$0xff]
  %v188 = vld [vmem:[%s7 + $0x168] sm:$0xff]
  %v189 = vld [vmem:[%s7 + $0x170] sm:$0xff]
  %v190 = vld [vmem:[%s7 + $0x178] sm:$0xff]
  %v191 = vld [vmem:[%s7 + $0x180] sm:$0xff]
  %v192 = vld [vmem:[%s7 + $0x188] sm:$0xff]
  %v193 = vld [vmem:[%s7 + $0x190] sm:$0xff]
  %v194 = vld [vmem:[%s7 + $0x198] sm:$0xff]
  %v195 = vld [vmem:[%s7 + $0x1a0] sm:$0xff]
  %v196 = vld [vmem:[%s7 + $0x1a8] sm:$0xff]
  %v197 = vld [vmem:[%s7 + $0x1b0] sm:$0xff]
  %v198 = vld [vmem:[%s7 + $0x1b8] sm:$0xff]
  %v199 = vld [vmem:[%s7 + $0x1c0] sm:$0xff]
  %v200 = vld [vmem:[%s7 + $0x1c8] sm:$0xff]
  %v201 = vld [vmem:[%s7 + $0x1d0] sm:$0xff]
  %v202 = vld [vmem:[%s7 + $0x1d8] sm:$0xff]
  %v203 = vld [vmem:[%s7 + $0x1e0] sm:$0xff]
  %v204 = vld [vmem:[%s7 + $0x1e8] sm:$0xff]
  %v205 = vld [vmem:[%s7 + $0x1f0] sm:$0xff]
  %v206 = vld [vmem:[%s7 + $0x1f8] sm:$0xff]
  %v207 = vld [vmem:[%s7 + $0x200] sm:$0xff]
  %v208 = vld [vmem:[%s7 + $0x208] sm:$0xff]
  %v209 = vld [vmem:[%s7 + $0x210] sm:$0xff]
  %v210 = vld [vmem:[%s7 + $0x218] sm:$0xff]
  %v211 = vld [vmem:[%s7 + $0x220] sm:$0xff]
  %v212 = vld [vmem:[%s7 + $0x228] sm:$0xff]
  %v213 = vld [vmem:[%s7 + $0x230] sm:$0xff]
  %v214 = vld [vmem:[%s7 + $0x238] sm:$0xff]
  %v215 = vld [vmem:[%s7 + $0x240] sm:$0xff]
  %v216 = vld [vmem:[%s7 + $0x248] sm:$0xff]
  %v217 = vld [vmem:[%s7 + $0x250] sm:$0xff]
  %v218 = vld [vmem:[%s7 + $0x258] sm:$0xff]
  %v219 = vld [vmem:[%s7 + $0x260] sm:$0xff]
  %v220 = vld [vmem:[%s7 + $0x268] sm:$0xff]
  %v221 = vld [vmem:[%s7 + $0x270] sm:$0xff]
  %v222 = vld [vmem:[%s7 + $0x278] sm:$0xff]
  %v223 = vld [vmem:[%s7 + $0x280] sm:$0xff]
  %v224 = vld [vmem:[%s7 + $0x288] sm:$0xff]
  %v225 = vld [vmem:[%s7 + $0x290] sm:$0xff]
  %v226 = vld [vmem:[%s7 + $0x298] sm:$0xff]
  %v227 = vld [vmem:[%s7 + $0x2a0] sm:$0xff]
  %v228 = vld [vmem:[%s7 + $0x2a8] sm:$0xff]
  %v229 = vld [vmem:[%s7 + $0x2b0] sm:$0xff]
  %v230 = vld [vmem:[%s7 + $0x2b8] sm:$0xff]
  %v231 = vld [vmem:[%s7 + $0x2c0] sm:$0xff]
  %v232 = vld [vmem:[%s7 + $0x2c8] sm:$0xff]
  %v233 = vld [vmem:[%s7 + $0x2d0] sm:$0xff]
  %v234 = vld [vmem:[%s7 + $0x2d8] sm:$0xff]
  %v235 = vld [vmem:[%s7 + $0x2e0] sm:$0xff]
  %v236 = vld [vmem:[%s7 + $0x2e8] sm:$0xff]
  %v237 = vld [vmem:[%s7 + $0x2f0] sm:$0xff]
  %v238 = vld [vmem:[%s7 + $0x2f8] sm:$0xff]
  %v239 = vld [vmem:[%s7 + $0x300] sm:$0xff]
  %v240 = vld [vmem:[%s7 + $0x308] sm:$0xff]
  %v241 = vld [vmem:[%s7 + $0x310] sm:$0xff]
  %v242 = vld [vmem:[%s7 + $0x318] sm:$0xff]
  %v243 = vld [vmem:[%s7 + $0x320] sm:$0xff]
  %v244 = vld [vmem:[%s7 + $0x328] sm:$0xff]
  %v245 = vld [vmem:[%s7 + $0x330] sm:$0xff]
  %v246 = vld [vmem:[%s7 + $0x338] sm:$0xff]
  %v247 = vld [vmem:[%s7 + $0x340] sm:$0xff]
  %v248 = vld [vmem:[%s7 + $0x348] sm:$0xff]
  %v249 = vld [vmem:[%s7 + $0x350] sm:$0xff]
  %v250 = vld [vmem:[%s7 + $0x358] sm:$0xff]
  %v251 = vld [vmem:[%s7 + $0x360] sm:$0xff]
  %v252 = vld [vmem:[%s7 + $0x368] sm:$0xff]
  %v253 = vld [vmem:[%s7 + $0x370] sm:$0xff]
  %v254 = vld [vmem:[%s7 + $0x378] sm:$0xff]
  %v255 = vld [vmem:[%s8] sm:$0x7f]
  %v257 = vperm.slane %v255, 0
  %v258 = vperm.slane %v255, 1
  %v259 = vperm.slane %v255, 2
  %v260 = vperm.slane %v255, 3
  %v261 = vperm.slane %v255, 4
  %v262 = vperm.slane %v255, 5
  %v263 = vperm.slane %v255, 6
  %271 = vmatpush.msra.mxu0 %v248
  %272 = vmatpush.msra.mxu0 %v241
  %273 = vmatpush.msra.mxu0 %v234
  %274 = vmatpush.msra.mxu0 %v227
  %275 = vmatpush.msra.mxu0 %v220
  %276 = vmatpush.msra.mxu0 %v213
  %277 = vmatpush.msra.mxu0 %v206
  %278 = vmatpush.msra.mxu0 %v199
  %279 = vmatpush.msra.mxu0 %v192
  %280 = vmatpush.msra.mxu0 %v185
  %281 = vmatpush.msra.mxu0 %v178
  %282 = vmatpush.msra.mxu0 %v171
  %283 = vmatpush.msra.mxu0 %v164
  %284 = vmatpush.msra.mxu0 %v157
  %285 = vmatpush.msra.mxu0 %v150
  %286 = vmatpush.msra.mxu0 %v143
  %287 = vmatmul.f32.gmra.mxu0 %v140
  %v288 = vpop.f32.mrf.mxu0
  %v289 = vadd.f32 %v257, %v288
  %290 = vdwg.mxu0
  %291 = vmatpush.msra.mxu0 %v249
  %292 = vmatpush.msra.mxu0 %v242
  %293 = vmatpush.msra.mxu0 %v235
  %294 = vmatpush.msra.mxu0 %v228
  %295 = vmatpush.msra.mxu0 %v221
  %296 = vmatpush.msra.mxu0 %v214
  %297 = vmatpush.msra.mxu0 %v207
  %298 = vmatpush.msra.mxu0 %v200
  %299 = vmatpush.msra.mxu0 %v193
  %300 = vmatpush.msra.mxu0 %v186
  %301 = vmatpush.msra.mxu0 %v179
  %302 = vmatpush.msra.mxu0 %v172
  %303 = vmatpush.msra.mxu0 %v165
  %304 = vmatpush.msra.mxu0 %v158
  %305 = vmatpush.msra.mxu0 %v151
  %306 = vmatpush.msra.mxu0 %v144
  %307 = vmatmul.f32.gmra.mxu0 %v140
  %v308 = vpop.f32.mrf.mxu0
  %v309 = vadd.f32 %v258, %v308
  %310 = vdwg.mxu0
  %311 = vmatpush.msra.mxu0 %v250
  %312 = vmatpush.msra.mxu0 %v243
  %313 = vmatpush.msra.mxu0 %v236
  %314 = vmatpush.msra.mxu0 %v229
  %315 = vmatpush.msra.mxu0 %v222
  %316 = vmatpush.msra.mxu0 %v215
  %317 = vmatpush.msra.mxu0 %v208
  %318 = vmatpush.msra.mxu0 %v201
  %319 = vmatpush.msra.mxu0 %v194
  %320 = vmatpush.msra.mxu0 %v187
  %321 = vmatpush.msra.mxu0 %v180
  %322 = vmatpush.msra.mxu0 %v173
  %323 = vmatpush.msra.mxu0 %v166
  %324 = vmatpush.msra.mxu0 %v159
  %325 = vmatpush.msra.mxu0 %v152
  %326 = vmatpush.msra.mxu0 %v145
  %327 = vmatmul.f32.gmra.mxu0 %v140
  %v328 = vpop.f32.mrf.mxu0
  %v329 = vadd.f32 %v259, %v328
  %330 = vdwg.mxu0
  %331 = vmatpush.msra.mxu0 %v251
  %332 = vmatpush.msra.mxu0 %v244
  %333 = vmatpush.msra.mxu0 %v237
  %334 = vmatpush.msra.mxu0 %v230
  %335 = vmatpush.msra.mxu0 %v223
  %336 = vmatpush.msra.mxu0 %v216
  %337 = vmatpush.msra.mxu0 %v209
  %338 = vmatpush.msra.mxu0 %v202
  %339 = vmatpush.msra.mxu0 %v195
  %340 = vmatpush.msra.mxu0 %v188
  %341 = vmatpush.msra.mxu0 %v181
  %342 = vmatpush.msra.mxu0 %v174
  %343 = vmatpush.msra.mxu0 %v167
  %344 = vmatpush.msra.mxu0 %v160
  %345 = vmatpush.msra.mxu0 %v153
  %346 = vmatpush.msra.mxu0 %v146
  %347 = vmatmul.f32.gmra.mxu0 %v140
  %v348 = vpop.f32.mrf.mxu0
  %v349 = vadd.f32 %v260, %v348
  %350 = vdwg.mxu0
  %351 = vmatpush.msra.mxu0 %v252
  %352 = vmatpush.msra.mxu0 %v245
  %353 = vmatpush.msra.mxu0 %v238
  %354 = vmatpush.msra.mxu0 %v231
  %355 = vmatpush.msra.mxu0 %v224
  %356 = vmatpush.msra.mxu0 %v217
  %357 = vmatpush.msra.mxu0 %v210
  %358 = vmatpush.msra.mxu0 %v203
  %359 = vmatpush.msra.mxu0 %v196
  %360 = vmatpush.msra.mxu0 %v189
  %361 = vmatpush.msra.mxu0 %v182
  %362 = vmatpush.msra.mxu0 %v175
  %363 = vmatpush.msra.mxu0 %v168
  %364 = vmatpush.msra.mxu0 %v161
  %365 = vmatpush.msra.mxu0 %v154
  %366 = vmatpush.msra.mxu0 %v147
  %367 = vmatmul.f32.gmra.mxu0 %v140
  %v368 = vpop.f32.mrf.mxu0
  %v369 = vadd.f32 %v261, %v368
  %370 = vdwg.mxu0
  %371 = vmatpush.msra.mxu0 %v253
  %372 = vmatpush.msra.mxu0 %v246
  %373 = vmatpush.msra.mxu0 %v239
  %374 = vmatpush.msra.mxu0 %v232
  %375 = vmatpush.msra.mxu0 %v225
  %376 = vmatpush.msra.mxu0 %v218
  %377 = vmatpush.msra.mxu0 %v211
  %378 = vmatpush.msra.mxu0 %v204
  %379 = vmatpush.msra.mxu0 %v197
  %380 = vmatpush.msra.mxu0 %v190
  %381 = vmatpush.msra.mxu0 %v183
  %382 = vmatpush.msra.mxu0 %v176
  %383 = vmatpush.msra.mxu0 %v169
  %384 = vmatpush.msra.mxu0 %v162
  %385 = vmatpush.msra.mxu0 %v155
  %386 = vmatpush.msra.mxu0 %v148
  %387 = vmatmul.f32.gmra.mxu0 %v140
  %v388 = vpop.f32.mrf.mxu0
  %v389 = vadd.f32 %v262, %v388
  %390 = vdwg.mxu0
  %391 = vmatpush.msra.mxu0 %v254
  %392 = vmatpush.msra.mxu0 %v247
  %393 = vmatpush.msra.mxu0 %v240
  %394 = vmatpush.msra.mxu0 %v233
  %395 = vmatpush.msra.mxu0 %v226
  %396 = vmatpush.msra.mxu0 %v219
  %397 = vmatpush.msra.mxu0 %v212
  %398 = vmatpush.msra.mxu0 %v205
  %399 = vmatpush.msra.mxu0 %v198
  %400 = vmatpush.msra.mxu0 %v191
  %401 = vmatpush.msra.mxu0 %v184
  %402 = vmatpush.msra.mxu0 %v177
  %403 = vmatpush.msra.mxu0 %v170
  %404 = vmatpush.msra.mxu0 %v163
  %405 = vmatpush.msra.mxu0 %v156
  %406 = vmatpush.msra.mxu0 %v149
  %407 = vmatmul.f32.gmra.mxu0 %v140
  %v408 = vpop.f32.mrf.mxu0
  %v409 = vadd.f32 %v263, %v408
  %410 = vdwg.mxu0
  %411 = vst [vmem:[%s9] sm:$0xff] %v289
  %412 = vst [vmem:[%s9 + $0x8] sm:$0xff] %v309
  %413 = vst [vmem:[%s9 + $0x10] sm:$0xff] %v329
  %414 = vst [vmem:[%s9 + $0x18] sm:$0xff] %v349
  %415 = vst [vmem:[%s9 + $0x20] sm:$0xff] %v369
  %416 = vst [vmem:[%s9 + $0x28] sm:$0xff] %v389
  %vm417 = vcmask 130048
  %418 = vst.msk [vmem:[%s9 + $0x30] sm:$0xff] %vm417, %v409
  // Predicated region
  $region38: #{mlp_decoder_forward.1} parent=0 // pred_check
    _
  $region39: #{mlp_decoder_forward.1} parent=0 // pred_check_branch
    %420 = sbr.rel (0) target = $region41
  $region40: #{mlp_decoder_forward.1} parent=0 // pred_region
    _
  $region41: #{mlp_decoder_forward.1} parent=0 // pred_fallthru
    _
  // Predicated region
  $region42: #{mlp_decoder_forward.1} parent=0 // pred_check
    _
  $region43: #{mlp_decoder_forward.1} parent=0 // pred_check_branch
    %422 = sbr.rel (0) target = $region45
  $region44: #{mlp_decoder_forward.1} parent=0 // pred_region
    _
  $region45: #{mlp_decoder_forward.1} parent=0 // pred_fallthru
    _
  // Predicated region
  $region46: #{mlp_decoder_forward.1} parent=0 // pred_check
    _
  $region47: #{mlp_decoder_forward.1} parent=0 // pred_check_branch
    %424 = sbr.rel (0) target = $region49
  $region48: #{mlp_decoder_forward.1} parent=0 // pred_region
    _
  $region49: #{mlp_decoder_forward.1} parent=0 // pred_fallthru
    _
  // Predicated region
  $region50: #{mlp_decoder_forward.1} parent=0 // pred_check
    _
  $region51: #{mlp_decoder_forward.1} parent=0 // pred_check_branch
    %426 = sbr.rel (0) target = $region53
  $region52: #{mlp_decoder_forward.1} parent=0 // pred_region
    _
  $region53: #{mlp_decoder_forward.1} parent=0 // pred_fallthru
    _

</llo_original>
